<compile_context>
chip_gen: v6e
topology: v6e:2x2x1
jax: 0.10.0
libtpu: 0.0.40
codegen_flags: <defaults>
</compile_context>

<pallas_src>
import numpy as np

import jax
import jax.numpy as jnp
from jax.experimental import pallas as pl
from jax.experimental.pallas import tpu as pltpu


_LANE = 128
_SUBLANE = 8
_NEG_BIG = -1e30   # pad value for dead class columns


def _round_up(x, m):
    return ((x + m - 1) // m) * m


def _every_step_loss_kernel(logits_ref, tgt_ref, w_ref, part_ref):
    """One row tile: per-row log-softmax CE * weight, reduced to a scalar partial."""
    x = logits_ref[...].astype(jnp.float32)          # (TILE_N, C_pad)
    t = tgt_ref[...]                                  # (TILE_N, 1) int32
    w = w_ref[...].astype(jnp.float32)                # (TILE_N, 1) f32

    # Row-wise cross entropy: logsumexp(x) - x[target]
    m = jnp.max(x, axis=-1, keepdims=True)                               # (TILE_N, 1)
    lse = jnp.log(jnp.sum(jnp.exp(x - m), axis=-1, keepdims=True)) + m   # (TILE_N, 1)
    class_ids = jax.lax.broadcasted_iota(jnp.int32, x.shape, 1)          # (TILE_N, C_pad)
    tgt_logit = jnp.sum(jnp.where(class_ids == t, x, 0.0),
                        axis=-1, keepdims=True)                          # (TILE_N, 1)
    ce = lse - tgt_logit                                                 # (TILE_N, 1)

    # Padded rows carry weight 0 -> contribute nothing to the partial sum.
    partial = jnp.sum(ce * w)
    # Lane/sublane-dense scalar write-back (one full vreg) -> unmasked vst.
    part_ref[...] = jnp.full(part_ref.shape, partial, dtype=jnp.float32)


def _segment_softmax_weights(lengths, gamma):
    """Vectorized host-side exp_weights: per-sequence softmax(linspace(-g, g, L))."""
    lens = np.asarray(lengths, dtype=np.int64)
    assert lens.ndim == 1 and lens.size > 0 and np.all(lens > 0), "lengths must be positive"
    n = int(lens.sum())
    num_seqs = int(lens.size)
    seg_ids = np.repeat(np.arange(num_seqs), lens)
    starts = np.cumsum(lens) - lens
    pos = np.arange(n) - starts[seg_ids]
    step = 2.0 * float(gamma) / np.maximum(lens[seg_ids] - 1.0, 1.0)
    lin = -float(gamma) + pos * step                   # == linspace(-g, g, L)[pos]
    seg_max = np.full(num_seqs, -np.inf)
    np.maximum.at(seg_max, seg_ids, lin)
    e = np.exp(lin - seg_max[seg_ids])
    seg_sum = np.zeros(num_seqs)
    np.add.at(seg_sum, seg_ids, e)
    w = (e / seg_sum[seg_ids]).astype(np.float32)
    return w, n, num_seqs


def every_step_loss(outputs, targets, lengths, gamma, *, tile_n=None):
    """outputs: float[N, C] (f32 or bf16); targets: int[N]; lengths: python ints."""
    n, c = outputs.shape
    w_np, n_w, num_seqs = _segment_softmax_weights(lengths, gamma)
    assert n_w == n, "sum(lengths) must equal N"

    # ---- Layout: pad classes to a lane multiple; rows to a sublane/tile multiple ----
    c_pad = _round_up(c, _LANE)
    itemsize = jnp.dtype(outputs.dtype).itemsize
    if tile_n is None:
        # ~4 MiB per logits tile.  Double-buffered (8 MiB) plus in-kernel f32
        # temporaries stays comfortably inside scoped VMEM on all chips, while
        # keeping the ~0.35 us/step grid overhead negligible.
        budget = 4 * 1024 * 1024
        tile_n = (budget // (c_pad * itemsize)) // _SUBLANE * _SUBLANE
        tile_n = max(_SUBLANE, min(1024, int(tile_n)))
    tile_n = max(_SUBLANE, _round_up(int(tile_n), _SUBLANE))
    tile_n = min(tile_n, _round_up(n, _SUBLANE))       # don't over-pad tiny inputs
    n_pad = _round_up(n, tile_n)
    num_tiles = n_pad // tile_n

    x = outputs
    if n_pad != n:
        x = jnp.pad(x, ((0, n_pad - n), (0, 0)))                             # pad rows: 0
    if c_pad != c:
        x = jnp.pad(x, ((0, 0), (0, c_pad - c)), constant_values=_NEG_BIG)   # dead classes

    tgt = jnp.pad(targets.astype(jnp.int32), (0, n_pad - n)).reshape(n_pad, 1)
    w = jnp.pad(jnp.asarray(w_np), (0, n_pad - n)).reshape(n_pad, 1)         # pad weight: 0

    partials = pl.pallas_call(
        _every_step_loss_kernel,
        out_shape=jax.ShapeDtypeStruct((num_tiles, _SUBLANE, _LANE), jnp.float32),
        grid_spec=pltpu.PrefetchScalarGridSpec(
            num_scalar_prefetch=0,
            grid=(num_tiles,),
            in_specs=[
                pl.BlockSpec((tile_n, c_pad), lambda i: (i, 0)),   # logits row tile
                pl.BlockSpec((tile_n, 1), lambda i: (i, 0)),       # targets
                pl.BlockSpec((tile_n, 1), lambda i: (i, 0)),       # exp_weights
            ],
            out_specs=pl.BlockSpec((1, _SUBLANE, _LANE), lambda i: (i, 0, 0)),
        ),
        compiler_params=pltpu.CompilerParams(
            dimension_semantics=("parallel",),          # independent tiles -> megacore
            vmem_limit_bytes=48 * 1024 * 1024,
        ),
    )(x, tgt, w)

    # Tiny final reduction over per-tile partial sums, divided by #sequences.
    return jnp.sum(partials[:, 0, 0]) / float(num_seqs)


def _reference(outputs, targets, lengths, gamma):
    # Pure-JAX reference of the PyTorch forward.
    logp = jax.nn.log_softmax(outputs.astype(jnp.float32), axis=-1)
    ce = -jnp.take_along_axis(logp, targets.reshape(-1, 1).astype(jnp.int32), axis=-1)[:, 0]
    segs = []
    for l in lengths:
        lin = jnp.linspace(-gamma, gamma, int(l), dtype=jnp.float32)
        segs.append(jax.nn.softmax(lin, axis=0))
    w = jnp.concatenate(segs, axis=0)
    return jnp.dot(ce, w) / float(len(lengths))


if __name__ == "__main__":
    key = jax.random.PRNGKey(0)
    gamma = 2.0
    lengths = [3, 5, 7, 11]        # 4 sequences, N = 26 time-steps (not a tile multiple)
    N = sum(lengths)
    C = 32                         # number of classes (padded to 128 lanes internally)

    k1, k2 = jax.random.split(key)
    outputs = jax.random.normal(k1, (N, C), dtype=jnp.float32)
    targets = jax.random.randint(k2, (N,), 0, C, dtype=jnp.int32)

    # Small tile to exercise the row-tiled grid and the padded partial-tile path.
    loss = every_step_loss(outputs, targets, lengths, gamma, tile_n=8)
    loss = jax.block_until_ready(loss)

    ref = _reference(outputs, targets, lengths, gamma)
    assert jnp.allclose(loss, ref, atol=1e-5, rtol=1e-5), (loss, ref)
    print("KERNEL_OK")
</pallas_src>

<mosaic_0001>
module attributes {stable_mosaic.version = 11 : i64} {
  func.func @_every_step_loss_kernel(%arg0: i32, %arg1: memref<8x128xf32, #tpu.memory_space<vmem>>, %arg2: memref<8x1xi32, #tpu.memory_space<vmem>>, %arg3: memref<8x1xf32, #tpu.memory_space<vmem>>, %arg4: memref<1x8x128xf32, #tpu.memory_space<vmem>>) attributes {dimension_semantics = [#tpu.dimension_semantics<parallel>], iteration_bounds = array<i64: 4>, scalar_prefetch = 0 : i64, scratch_operands = 0 : i64, tpu.core_type = #tpu.core_type<tc>, window_params = [{transform_indices = @transform_0, window_bounds = array<i64: 8, 128>}, {transform_indices = @transform_1, window_bounds = array<i64: 8, 1>}, {transform_indices = @transform_2, window_bounds = array<i64: 8, 1>}, {transform_indices = @transform_3, window_bounds = array<i64: 1, 8, 128>}]} {
    %c0 = arith.constant 0 : index
    %c0_0 = arith.constant 0 : index
    %0 = vector.load %arg1[%c0, %c0_0] : memref<8x128xf32, #tpu.memory_space<vmem>>, vector<8x128xf32>
    %c0_1 = arith.constant 0 : index
    %c0_2 = arith.constant 0 : index
    %1 = vector.load %arg2[%c0_1, %c0_2] : memref<8x1xi32, #tpu.memory_space<vmem>>, vector<8x1xi32>
    %c0_3 = arith.constant 0 : index
    %c0_4 = arith.constant 0 : index
    %2 = vector.load %arg3[%c0_3, %c0_4] : memref<8x1xf32, #tpu.memory_space<vmem>>, vector<8x1xf32>
    %cst = arith.constant dense<0xFF800000> : vector<8xf32>
    %3 = vector.multi_reduction <maximumf>, %0, %cst [1] : vector<8x128xf32> to vector<8xf32>
    %4 = vector.shape_cast %3 : vector<8xf32> to vector<8x1xf32>
    %5 = vector.broadcast %4 : vector<8x1xf32> to vector<8x128xf32>
    %6 = arith.subf %0, %5 : vector<8x128xf32>
    %7 = math.exp %6 : vector<8x128xf32>
    %cst_5 = arith.constant dense<0.000000e+00> : vector<8xf32>
    %8 = vector.multi_reduction <add>, %7, %cst_5 [1] : vector<8x128xf32> to vector<8xf32>
    %9 = vector.shape_cast %8 : vector<8xf32> to vector<8x1xf32>
    %10 = math.log %9 : vector<8x1xf32>
    %11 = arith.addf %10, %4 : vector<8x1xf32>
    %12 = tpu.iota {dimensions = array<i32: 1>} : vector<8x128xi32>
    %13 = vector.broadcast %1 : vector<8x1xi32> to vector<8x128xi32>
    %14 = arith.cmpi eq, %12, %13 : vector<8x128xi32>
    %cst_6 = arith.constant 0.000000e+00 : f32
    %15 = vector.broadcast %cst_6 : f32 to vector<8x128xf32>
    %16 = arith.select %14, %0, %15 : vector<8x128xi1>, vector<8x128xf32>
    %cst_7 = arith.constant dense<0.000000e+00> : vector<8xf32>
    %17 = vector.multi_reduction <add>, %16, %cst_7 [1] : vector<8x128xf32> to vector<8xf32>
    %18 = vector.shape_cast %17 : vector<8xf32> to vector<8x1xf32>
    %19 = arith.subf %11, %18 : vector<8x1xf32>
    %20 = arith.mulf %19, %2 : vector<8x1xf32>
    %21 = vector.shape_cast %20 : vector<8x1xf32> to vector<1x8x1xf32>
    %cst_8 = arith.constant dense<0.000000e+00> : vector<1xf32>
    %22 = vector.multi_reduction <add>, %21, %cst_8 [1, 2] : vector<1x8x1xf32> to vector<1xf32>
    %23 = vector.shape_cast %22 : vector<1xf32> to vector<1x1x1xf32>
    %24 = vector.extract %23[0, 0, 0] : f32 from vector<1x1x1xf32>
    %25 = vector.broadcast %24 : f32 to vector<1x8x128xf32>
    %c0_9 = arith.constant 0 : index
    %c0_10 = arith.constant 0 : index
    %c0_11 = arith.constant 0 : index
    %26 = vector.load %arg4[%c0_9, %c0_10, %c0_11] : memref<1x8x128xf32, #tpu.memory_space<vmem>>, vector<1x8x128xf32>
    tpu.vector_store %arg4[%c0_9, %c0_10, %c0_11], %25 {strides = array<i32>} : memref<1x8x128xf32, #tpu.memory_space<vmem>>, vector<1x8x128xf32>,
    return
  }
  func.func @transform_0(%arg0: i32) -> (i32, i32) {
    %c0_i32 = arith.constant 0 : i32
    %c0_i32_0 = arith.constant 0 : i32
    return %arg0, %c0_i32 : i32, i32
  }
  func.func @transform_1(%arg0: i32) -> (i32, i32) {
    %c0_i32 = arith.constant 0 : i32
    %c0_i32_0 = arith.constant 0 : i32
    return %arg0, %c0_i32 : i32, i32
  }
  func.func @transform_2(%arg0: i32) -> (i32, i32) {
    %c0_i32 = arith.constant 0 : i32
    %c0_i32_0 = arith.constant 0 : i32
    return %arg0, %c0_i32 : i32, i32
  }
  func.func @transform_3(%arg0: i32) -> (i32, i32, i32) {
    %c0_i32 = arith.constant 0 : i32
    %c0_i32_0 = arith.constant 0 : i32
    %c0_i32_1 = arith.constant 0 : i32
    return %arg0, %c0_i32, %c0_i32_0 : i32, i32, i32
  }
}

</mosaic_0001>

<llo_original>
// kernel: tpu_custom_call.1
$region0: #{tpu_custom_call.1}
  #allocation0 [shape = 'u32[]', space=smem, size = 0x4, offset = 0x4, fixed_abs, tag = 'smem constant byte address 0x4 - core index']
  #allocation1 [shape = 'u32[144,128]{1,0:T(1,128)}', space=vmem, size = 0x12000, scoped, tag = 'internal scratch']
  %s0 = inlined_call_operand.vmem [shape: f32[32,128], index: 0, kind: input, shape index: {}]
  %s1 = inlined_call_operand.vmem [shape: s32[32,1], index: 1, kind: input, shape index: {}]
  %s2 = inlined_call_operand.vmem [shape: f32[32,1], index: 2, kind: input, shape index: {}]
  %s3 = inlined_call_operand.hbm [shape: f32[4,8,128], index: 3, kind: output, shape index: {}]
  %s4 = sld [smem:[#allocation0]]
  $region45: #{tpu_custom_call.1} parent=0
    _
  %s6 = ssub.s32 1, %s4
  %s7 = scalar_select 0, %s6, %s4
  $region1: #{tpu_custom_call.1} parent=0
    #allocation2 [shape = 'u8[8192]{0}', space=vmem, size = 0x2000, scoped, tag = 'output window, operand 0']
    #allocation3 [shape = 's32[2]{0}', space=sflag, size = 0x8, scoped, tag = 'scoped memory for tpu_custom_call.1']
    %8 = vsyncpa [#allocation3], 0
    %s9 = scalar_lea.sflag [#allocation3], 1
    %10 = vsyncpa %s9, 0
    loop: start=0, step=1, limit=6
    $region2: #{tpu_custom_call.1} parent=1 // loop_pre_header
      _
    $region3: #{tpu_custom_call.1} parent=1 // loop_header
      %s12 = sphi 0, %s16
      %p13 = scmp.ge.s32.totalorder %s12, 6
      %s22 = sphi 0, %s24
      %s25 = sphi 0, %s22
      %s26 = sphi 0, %s25
      %s42 = sphi 0, %s26
      %s48 = sphi 0, %s50
      %s51 = sphi 0, %s48
      %s52 = sphi 0, %s51
      %s68 = sphi 0, %s52
      %s74 = sphi 0, %s76
      %s77 = sphi 0, %s74
      %s78 = sphi 0, %s77
      %s94 = sphi 0, %s78
      %s100 = sphi 0, %s102
      %s103 = sphi 0, %s100
      %s104 = sphi 0, %s103
      %s120 = sphi 0, %s104
    $region4: #{tpu_custom_call.1} parent=1 // loop_header_branch
      %15 = sbr.rel (%p13) target = $region8
    $region5: #{tpu_custom_call.1} parent=1 // loop_body
      %s17 = ssub.s32 %s12, 1
      %s18 = ssub.s32 %s12, 2
      %s19 = sadd.s32 %s12, 1
      %s20 = ssub.s32 %s12, %s19
      %p21 = scmp.eq.s32.totalorder %s20, 0
      %s23 = sadd.s32 %s22, 1
      %s24 = scalar_select %p21, %s22, %s23
      %p27 = pneg %p21
      %p28 = scmp.eq.s32.totalorder %s12, 3
      %p29 = por %p27, %p28
      %p30 = scmp.ne.s32.totalorder %s22, %s25
      %p31 = scmp.eq.s32.totalorder %s12, 0
      %p32 = por %p30, %p31
      %p33 = scmp.ne.s32.totalorder %s22, %s25
      %p34 = scmp.eq.s32.totalorder %s17, 3
      %p35 = por %p33, %p34
      %p36 = scmp.ne.s32.totalorder %s25, %s26
      %p37 = scmp.eq.s32.totalorder %s17, 0
      %p38 = por %p36, %p37
      %p39 = scmp.ne.s32.totalorder %s25, %s26
      %p40 = scmp.eq.s32.totalorder %s18, 3
      %p41 = por %p39, %p40
      %p43 = scmp.ne.s32.totalorder %s26, %s42
      %p44 = scmp.eq.s32.totalorder %s18, 0
      %p45 = por %p43, %p44
      %s46 = ssub.s32 %s12, %s19
      %p47 = scmp.eq.s32.totalorder %s46, 0
      %s49 = sadd.s32 %s48, 1
      %s50 = scalar_select %p47, %s48, %s49
      %p53 = pneg %p47
      %p54 = scmp.eq.s32.totalorder %s12, 3
      %p55 = por %p53, %p54
      %p56 = scmp.ne.s32.totalorder %s48, %s51
      %p57 = scmp.eq.s32.totalorder %s12, 0
      %p58 = por %p56, %p57
      %p59 = scmp.ne.s32.totalorder %s48, %s51
      %p60 = scmp.eq.s32.totalorder %s17, 3
      %p61 = por %p59, %p60
      %p62 = scmp.ne.s32.totalorder %s51, %s52
      %p63 = scmp.eq.s32.totalorder %s17, 0
      %p64 = por %p62, %p63
      %p65 = scmp.ne.s32.totalorder %s51, %s52
      %p66 = scmp.eq.s32.totalorder %s18, 3
      %p67 = por %p65, %p66
      %p69 = scmp.ne.s32.totalorder %s52, %s68
      %p70 = scmp.eq.s32.totalorder %s18, 0
      %p71 = por %p69, %p70
      %s72 = ssub.s32 %s12, %s19
      %p73 = scmp.eq.s32.totalorder %s72, 0
      %s75 = sadd.s32 %s74, 1
      %s76 = scalar_select %p73, %s74, %s75
      %p79 = pneg %p73
      %p80 = scmp.eq.s32.totalorder %s12, 3
      %p81 = por %p79, %p80
      %p82 = scmp.ne.s32.totalorder %s74, %s77
      %p83 = scmp.eq.s32.totalorder %s12, 0
      %p84 = por %p82, %p83
      %p85 = scmp.ne.s32.totalorder %s74, %s77
      %p86 = scmp.eq.s32.totalorder %s17, 3
      %p87 = por %p85, %p86
      %p88 = scmp.ne.s32.totalorder %s77, %s78
      %p89 = scmp.eq.s32.totalorder %s17, 0
      %p90 = por %p88, %p89
      %p91 = scmp.ne.s32.totalorder %s77, %s78
      %p92 = scmp.eq.s32.totalorder %s18, 3
      %p93 = por %p91, %p92
      %p95 = scmp.ne.s32.totalorder %s78, %s94
      %p96 = scmp.eq.s32.totalorder %s18, 0
      %p97 = por %p95, %p96
      %s98 = ssub.s32 %s12, %s19
      %p99 = scmp.eq.s32.totalorder %s98, 0
      %s101 = sadd.s32 %s100, 1
      %s102 = scalar_select %p99, %s100, %s101
      %p105 = pneg %p99
      %p106 = scmp.eq.s32.totalorder %s12, 3
      %p107 = por %p105, %p106
      %p108 = scmp.ne.s32.totalorder %s100, %s103
      %p109 = scmp.eq.s32.totalorder %s12, 0
      %p110 = por %p108, %p109
      %p111 = scmp.ne.s32.totalorder %s100, %s103
      %p112 = scmp.eq.s32.totalorder %s17, 3
      %p113 = por %p111, %p112
      %p114 = scmp.ne.s32.totalorder %s103, %s104
      %p115 = scmp.eq.s32.totalorder %s17, 0
      %p116 = por %p114, %p115
      %p117 = scmp.ne.s32.totalorder %s103, %s104
      %p118 = scmp.eq.s32.totalorder %s18, 3
      %p119 = por %p117, %p118
      %p121 = scmp.ne.s32.totalorder %s104, %s120
      %p122 = scmp.eq.s32.totalorder %s18, 0
      %p123 = por %p121, %p122
      %p124 = scmp.le.s32.totalorder 1, %s12
      %p125 = scmp.lt.s32.totalorder %s12, 5
      %p126 = pnand %p124, %p125
      %p127 = pneg %p126
      // Predicated region
      $region9: #{tpu_custom_call.1} parent=5 // pred_check
        _
      $region10: #{tpu_custom_call.1} parent=5 // pred_check_branch
        %129 = sbr.rel (%p126) target = $region12
      $region11: #{tpu_custom_call.1} parent=5 // pred_region
        %s130 = ssub.s32 %s12, 1
      $region12: #{tpu_custom_call.1} parent=5 // pred_fallthru
        _
      %p131 = scmp.lt.s32.totalorder %s12, 4
      // Predicated region
      $region13: #{tpu_custom_call.1} parent=5 // pred_check
        %p132 = pneg %p131
      $region14: #{tpu_custom_call.1} parent=5 // pred_check_branch
        %134 = sbr.rel (%p132) target = $region16
      $region15: #{tpu_custom_call.1} parent=5 // pred_region
        // Predicated region
        $region17: #{tpu_custom_call.1} parent=15 // pred_check
          %p135 = pneg %p32
        $region18: #{tpu_custom_call.1} parent=15 // pred_check_branch
          %137 = sbr.rel (%p135) target = $region20
        $region19: #{tpu_custom_call.1} parent=15 // pred_region
          %p138 = scmp.lt.s32.totalorder %s12, 3
          %s139 = scalar_select %p138, %s12, 3
          %s140 = smul.addr %s139, 8
          %s141 = scalar_lea.vmem %s0, %s140
        $region20: #{tpu_custom_call.1} parent=15 // pred_fallthru
          _
        // Predicated region
        $region21: #{tpu_custom_call.1} parent=15 // pred_check
          %p142 = pneg %p58
        $region22: #{tpu_custom_call.1} parent=15 // pred_check_branch
          %144 = sbr.rel (%p142) target = $region24
        $region23: #{tpu_custom_call.1} parent=15 // pred_region
          %p145 = scmp.lt.s32.totalorder %s12, 3
          %s146 = scalar_select %p145, %s12, 3
          %s147 = smul.addr %s146, 8
          %s148 = scalar_lea.vmem %s1, %s147
        $region24: #{tpu_custom_call.1} parent=15 // pred_fallthru
          _
        // Predicated region
        $region25: #{tpu_custom_call.1} parent=15 // pred_check
          %p149 = pneg %p84
        $region26: #{tpu_custom_call.1} parent=15 // pred_check_branch
          %151 = sbr.rel (%p149) target = $region28
        $region27: #{tpu_custom_call.1} parent=15 // pred_region
          %p152 = scmp.lt.s32.totalorder %s12, 3
          %s153 = scalar_select %p152, %s12, 3
          %s154 = smul.addr %s153, 8
          %s155 = scalar_lea.vmem %s2, %s154
        $region28: #{tpu_custom_call.1} parent=15 // pred_fallthru
          _
      $region16: #{tpu_custom_call.1} parent=5 // pred_fallthru
        _
      %p156 = scmp.le.s32.totalorder 1, %s12
      %p157 = scmp.lt.s32.totalorder %s12, 5
      %p158 = pnand %p156, %p157
      %p159 = pneg %p158
      // Predicated region
      $region29: #{tpu_custom_call.1} parent=5 // pred_check
        _
      $region30: #{tpu_custom_call.1} parent=5 // pred_check_branch
        %161 = sbr.rel (%p158) target = $region32
      $region31: #{tpu_custom_call.1} parent=5 // pred_region
        %s162 = ssub.s32 %s12, 1
        %p163 = scmp.lt.s32.totalorder %s17, 3
        %s164 = scalar_select %p163, %s17, 3
        %s165 = smul.addr %s164, 8
        %s166 = scalar_lea.vmem %s0, %s165
        %p167 = pneg %p38
        %p168 = pneg %p35
        %p169 = scmp.lt.s32.totalorder %s17, 3
        %s170 = scalar_select %p169, %s17, 3
        %s171 = smul.addr %s170, 8
        %s172 = scalar_lea.vmem %s1, %s171
        %p173 = pneg %p64
        %p174 = pneg %p61
        %p175 = scmp.lt.s32.totalorder %s17, 3
        %s176 = scalar_select %p175, %s17, 3
        %s177 = smul.addr %s176, 8
        %s178 = scalar_lea.vmem %s2, %s177
        %p179 = pneg %p90
        %p180 = pneg %p87
        %p181 = pneg %p116
        %p182 = pneg %p113
        %s183 = sand.u32 %s103, 1
        %s184 = scalar_lea.sflag [#allocation3], %s183
        %s185 = sand.u32 %s103, 1
        %s186 = smul.addr %s185, 8
        %s187 = scalar_lea.vmem [#allocation2], %s186
        %p188 = scmp.lt.s32.totalorder %s17, 3
        %s189 = scalar_select %p188, %s17, 3
        %s190 = smul.addr %s189, 8
        %s191 = scalar_lea.vmem %s0, %s190
        %p192 = scmp.lt.s32.totalorder %s17, 3
        %s193 = scalar_select %p192, %s17, 3
        %s194 = smul.addr %s193, 8
        %s195 = scalar_lea.vmem %s1, %s194
        %p196 = scmp.lt.s32.totalorder %s17, 3
        %s197 = scalar_select %p196, %s17, 3
        %s198 = smul.addr %s197, 8
        %s199 = scalar_lea.vmem %s2, %s198
        %v200 = vld [vmem:[%s191] sm:$0xff]
        %v201 = vld [vmem:[%s195] sm:$0xff]
        %v202 = vld [vmem:[%s199] sm:$0xff]
        %203 = vmax.xlane.f32.xlu0 %v200
        %v204 = vpop.xlane.xlu0 %203
        %v205 = vsub.f32 %v200, %v204
        %v206 = vmul.f32 %v205, 1.442695
        %v207 = vpow.pop %v206
        %208 = vadd.xlane.f32.xlu0 %v207
        %v209 = vpop.xlane.xlu0 %208
        %v210 = vlog2.pop %v209
        %v211 = vmul.f32 %v210, 0.6931472
        %v212 = vadd.f32 %v211, %v204
        %v213 = vlaneseq
        %v214 = vand.u32 %v213, 127
        %215 = vset.pattern.permute.xlu0 0
        %216 = vperm.xlu0 %215, %v201
        %v217 = vpop.permute.xlu0 %216
        %vm218 = vcmp.eq.s32.totalorder %v214, %v217
        %v219 = vsel %vm218, %v200, 0.0
        %220 = vadd.xlane.f32.xlu0 %v219
        %v221 = vpop.xlane.xlu0 %220
        %v222 = vsub.f32 %v212, %v221
        %v223 = vmul.f32 %v222, %v202
        %vm224 = vcmask 7168
        %v225 = vsel %vm224, %v223, 0.0
        %226 = vadd.xlane.f32.xlu0 %v225
        %v227 = vpop.xlane.xlu0 %226
        %v228 = vrot.slane %v227, 4
        %v229 = vadd.f32 %v227, %v228
        %v230 = vrot.slane %v229, 2
        %v231 = vadd.f32 %v229, %v230
        %v232 = vrot.slane %v231, 1
        %v233 = vadd.f32 %v231, %v232
        %s234 = vtos %v233
        %v235 = vstv %s234
        %236 = vst [vmem:[%s187] sm:$0xff] %v235
        %s237 = sand.u32 %s103, 1
        %s238 = scalar_lea.sflag [#allocation3], %s237
        %s239 = sand.u32 %s103, 1
        %s240 = smul.addr %s239, 8
        %s241 = scalar_lea.vmem [#allocation2], %s240
        // Predicated region
        $region33: #{tpu_custom_call.1} parent=31 // pred_check
          %p242 = pneg %p113
        $region34: #{tpu_custom_call.1} parent=31 // pred_check_branch
          %244 = sbr.rel (%p242) target = $region36
        $region35: #{tpu_custom_call.1} parent=31 // pred_region
          %s246 = ssub.s32 128, 128
          %247 = vsyncadd %s238, %s246
          %s248 = smul.addr %s17, 128
          %s249 = scalar_lea.hbm %s3, %s248
          %s251 = sshll.u32 %s241, 4
          %s252 = int_to_ptr.vmem [resolvable:$true] %s251
          %254 = dma.vmem_to_hbm [thread:$0]  %s252, 128, %s249, %s238
        $region36: #{tpu_custom_call.1} parent=31 // pred_fallthru
          _
      $region32: #{tpu_custom_call.1} parent=5 // pred_fallthru
        _
      %p255 = scmp.le.s32.totalorder 2, %s12
      // Predicated region
      $region37: #{tpu_custom_call.1} parent=5 // pred_check
        %p256 = pneg %p255
      $region38: #{tpu_custom_call.1} parent=5 // pred_check_branch
        %258 = sbr.rel (%p256) target = $region40
      $region39: #{tpu_custom_call.1} parent=5 // pred_region
        %s259 = ssub.s32 %s12, 2
        // Predicated region
        $region41: #{tpu_custom_call.1} parent=39 // pred_check
          %p260 = pneg %p119
        $region42: #{tpu_custom_call.1} parent=39 // pred_check_branch
          %262 = sbr.rel (%p260) target = $region44
        $region43: #{tpu_custom_call.1} parent=39 // pred_region
          %s263 = sand.u32 %s104, 1
          %s264 = scalar_lea.sflag [#allocation3], %s263
          %s265 = sand.u32 %s104, 1
          %s266 = smul.addr %s265, 8
          %s267 = scalar_lea.vmem [#allocation2], %s266
          %268 = dma.done %s264, 128
        $region44: #{tpu_custom_call.1} parent=39 // pred_fallthru
          _
      $region40: #{tpu_custom_call.1} parent=5 // pred_fallthru
        _
    $region6: #{tpu_custom_call.1} parent=1 // loop_footer
      %s16 = sadd.s32 1, %s12
    $region7: #{tpu_custom_call.1} parent=1 // loop_footer_branch
      %11 = sbr.rel target = $region3
    $region8: #{tpu_custom_call.1} parent=1 // loop_exit
      _
    %269 = vsyncpa [#allocation3], 1
    %s270 = scalar_lea.sflag [#allocation3], 1
    %271 = vsyncpa %s270, 1

</llo_original>
